<compile_context>
chip_gen: v7x
topology: tpu7x:2x2x1
jax: 0.10.0
libtpu: 0.0.40
codegen_flags: <defaults>
</compile_context>

<pallas_src>
import jax
import jax.numpy as jnp
from jax import lax
from jax.experimental import pallas as pl
from jax.experimental.pallas import tpu as pltpu

LN_EPS = 1e-5  # torch.nn.LayerNorm default


def _round_up(x, m):
    return (x + m - 1) // m * m


def _make_kernel(r, in_dim):
    """Kernel over a (tile, r*in_dim) row block; r logical rows per physical row."""

    def kernel(x_ref, gamma_ref, beta_ref, w1_ref, b1_ref, w2_ref, b2_ref, o_ref):
        gamma = gamma_ref[...]          # (1, in_dim)  f32
        beta = beta_ref[...]            # (1, in_dim)  f32
        w1 = w1_ref[...]                # (in_dim, mid_p) bf16, VMEM-resident
        b1 = b1_ref[...]                # (1, mid_p)   f32

        hs = []
        for j in range(r):              # static unroll (r is 1 or 2 here)
            # 128-aligned static lane slice of the ref -> cheap view, no relayout.
            xj = x_ref[:, j * in_dim:(j + 1) * in_dim].astype(jnp.float32)

            # ---- LayerNorm, one-pass f32 statistics ----
            mean = jnp.mean(xj, axis=-1, keepdims=True)
            msq = jnp.mean(xj * xj, axis=-1, keepdims=True)
            var = msq - mean * mean
            inv = lax.rsqrt(var + LN_EPS)
            xn = (xj - mean) * inv * gamma + beta

            # ---- Linear1 (+bias) + ReLU: bf16 MXU operands, f32 accumulation ----
            h = jnp.dot(xn.astype(jnp.bfloat16), w1,
                        preferred_element_type=jnp.float32)
            hs.append(jnp.maximum(h + b1, 0.0).astype(jnp.bfloat16))

        # ---- Dropout: nn.Dropout is identity in eval mode ----
        # TODO(synk): training-mode dropout (pltpu.prng_* stochastic mask) not emitted.

        # Segments concatenated at a 128-lane boundary (mid_p % 128 == 0):
        # pure vreg placement, no cross-lane relayout.
        hp = hs[0] if r == 1 else jnp.concatenate(hs, axis=-1)

        # ---- Linear2 against (block-diagonal when r > 1) w2: lane-dense result ----
        y = jnp.dot(hp, w2_ref[...], preferred_element_type=jnp.float32)
        y = y + b2_ref[...]
        o_ref[...] = y.astype(o_ref.dtype)

    return kernel


def mlp_adapter(x, params, *, row_tile=2048, out_dtype=jnp.bfloat16):
    """x: (B, S, in_dim) -> (B, S, out_dim).

    Pass x as bf16 for the fast path (half the input HBM traffic); any float
    dtype works -- LayerNorm statistics are always computed in f32 in-kernel.
    Output is bf16 by default (f32 accumulation, single final rounding).
    """
    gamma, beta, w1, b1, w2, b2 = params
    B, S, in_dim = x.shape
    mid = w1.shape[1]
    out_dim = w2.shape[1]
    N = B * S

    # ---- lane-dense packing factor: r logical rows per physical row ----
    r = 1
    if out_dim < 128 and 128 % out_dim == 0 and in_dim % 128 == 0:
        r_cand = 128 // out_dim
        if N % r_cand == 0:
            r = r_cand

    n_rows = N // r
    width = r * in_dim
    x2 = x.reshape(n_rows, width)       # free row-major view, no copy pass

    # ---- params: cast/pad once; all VMEM-resident via constant index_maps ----
    mid_p = _round_up(mid, 128)         # full-lane hidden dim (zero-padded)
    gamma2 = gamma.reshape(1, in_dim).astype(jnp.float32)
    beta2 = beta.reshape(1, in_dim).astype(jnp.float32)
    w1p = jnp.zeros((in_dim, mid_p), jnp.float32).at[:, :mid].set(
        w1.astype(jnp.float32)).astype(jnp.bfloat16)
    b1p = jnp.zeros((1, mid_p), jnp.float32).at[0, :mid].set(
        b1.astype(jnp.float32))
    w2p = jnp.zeros((mid_p, out_dim), jnp.float32).at[:mid, :].set(
        w2.astype(jnp.float32))
    if r == 1:
        w2d = w2p.astype(jnp.bfloat16)
        b2d = b2.reshape(1, out_dim).astype(jnp.float32)
    else:
        # Block-diagonal replication: one MXU pass emits all r packed segments
        # into a single lane-dense (tile, r*out_dim == 128) store.
        w2d = jnp.zeros((r * mid_p, r * out_dim), jnp.float32)
        for j in range(r):
            w2d = w2d.at[j * mid_p:(j + 1) * mid_p,
                         j * out_dim:(j + 1) * out_dim].set(w2p)
        w2d = w2d.astype(jnp.bfloat16)
        b2d = jnp.tile(b2.reshape(1, out_dim).astype(jnp.float32), (1, r))
    out_w = r * out_dim

    # ---- row tile: multiple of 8; cap at ceil(rows/2) so v7x gets >= 2 steps ----
    tn = max(8, _round_up(max(row_tile // r, 8), 8))
    tn = min(tn, _round_up(pl.cdiv(n_rows, 2), 8))
    grid = (pl.cdiv(n_rows, tn),)       # ragged last block handled by Pallas

    resident = lambda shape: pl.BlockSpec(shape, lambda i: (0, 0))

    out2 = pl.pallas_call(
        _make_kernel(r, in_dim),
        out_shape=jax.ShapeDtypeStruct((n_rows, out_w), out_dtype),
        grid_spec=pltpu.PrefetchScalarGridSpec(
            num_scalar_prefetch=0,
            grid=grid,
            in_specs=[
                pl.BlockSpec((tn, width), lambda i: (i, 0)),   # x rows (pipelined)
                resident(gamma2.shape),                        # gamma
                resident(beta2.shape),                         # beta
                resident(w1p.shape),                           # w1 (mid padded to 128)
                resident(b1p.shape),                           # b1
                resident(w2d.shape),                           # w2 (block-diag if r>1)
                resident(b2d.shape),                           # b2
            ],
            out_specs=pl.BlockSpec((tn, out_w), lambda i: (i, 0)),
        ),
        compiler_params=pltpu.CompilerParams(
            dimension_semantics=("parallel",)),
    )(x2, gamma2, beta2, w1p, b1p, w2d, b2d)

    # Free row-major un-pack: (N/r, r*out_dim) -> (B, S, out_dim).
    return out2.reshape(B, S, out_dim)


def make_params(key, in_dim, hidden_dim, out_dim, dtype=jnp.float32):
    """Deterministic synthetic parameters matching MLP_adapter.__init__ shapes."""
    mid = in_dim // hidden_dim
    k1, k2, k3, k4 = jax.random.split(key, 4)
    gamma = jnp.ones((in_dim,), dtype)
    beta = jnp.zeros((in_dim,), dtype)
    # nn.Linear stores weight as (out, in); we keep (in, out) for x @ W.
    w1 = jax.random.normal(k1, (in_dim, mid), dtype) * 0.02
    b1 = jax.random.normal(k2, (mid,), dtype) * 0.02
    w2 = jax.random.normal(k3, (mid, out_dim), dtype) * 0.02
    b2 = jax.random.normal(k4, (out_dim,), dtype) * 0.02
    return gamma, beta, w1, b1, w2, b2


def mlp_adapter_ref(x, params, out_dtype=jnp.bfloat16):
    """Reference mirroring the kernel's mixed precision (f32 LayerNorm stats,
    bf16 matmul operands, f32 accumulation, bf16 output).  Strict f32 torch
    parity would need f32 operands throughout."""
    gamma, beta, w1, b1, w2, b2 = params
    xf = x.astype(jnp.float32)
    mean = jnp.mean(xf, axis=-1, keepdims=True)
    var = jnp.mean(jnp.square(xf - mean), axis=-1, keepdims=True)
    xn = (xf - mean) * lax.rsqrt(var + LN_EPS) * gamma.astype(jnp.float32) \
        + beta.astype(jnp.float32)
    h = jnp.dot(xn.astype(jnp.bfloat16), w1.astype(jnp.bfloat16),
                preferred_element_type=jnp.float32) + b1.astype(jnp.float32)
    h = jnp.maximum(h, 0.0)
    y = jnp.dot(h.astype(jnp.bfloat16), w2.astype(jnp.bfloat16),
                preferred_element_type=jnp.float32) + b2.astype(jnp.float32)
    return y.astype(out_dtype)


if __name__ == "__main__":
    # Module-consistent small shapes: in_dim=128, hidden_dim=4 (mid=32), out_dim=64.
    in_dim, hidden_dim, out_dim = 128, 4, 64

    key = jax.random.PRNGKey(0)
    kp, k1, k2, k3 = jax.random.split(key, 4)
    params = make_params(kp, in_dim, hidden_dim, out_dim)

    def check(x, out):
        ref = mlp_adapter_ref(x, params)
        assert out.shape == ref.shape, (out.shape, ref.shape)
        assert jnp.allclose(out.astype(jnp.float32), ref.astype(jnp.float32),
                            atol=1e-2, rtol=1e-2), "mismatch vs reference"

    # Case 1: bf16 activations (intended fast path), tiny shape, packed lane-dense output.
    B, S = 2, 8
    x = jax.random.normal(k1, (B, S, in_dim), jnp.float32).astype(jnp.bfloat16)
    out = jax.block_until_ready(mlp_adapter(x, params))
    check(x, out)

    # Case 2: f32 input, row count not a tile multiple -> multi-step grid with
    # a ragged last block (no wrapper pad/slice).
    B2, S2 = 3, 50  # N = 150 (even -> packed path)
    x2 = jax.random.normal(k2, (B2, S2, in_dim), jnp.float32)
    out2 = jax.block_until_ready(mlp_adapter(x2, params, row_tile=64))
    check(x2, out2)

    # Case 3: odd row count -> lane packing not applicable, fallback layout.
    B3, S3 = 3, 5   # N = 15
    x3 = jax.random.normal(k3, (B3, S3, in_dim), jnp.float32).astype(jnp.bfloat16)
    out3 = jax.block_until_ready(mlp_adapter(x3, params))
    check(x3, out3)

    print("KERNEL_OK")
</pallas_src>

<mosaic_0001>
module attributes {stable_mosaic.version = 11 : i64} {
  func.func @kernel(%arg0: i32, %arg1: memref<8x256xbf16, #tpu.memory_space<vmem>>, %arg2: memref<1x128xf32, #tpu.memory_space<vmem>>, %arg3: memref<1x128xf32, #tpu.memory_space<vmem>>, %arg4: memref<128x128xbf16, #tpu.memory_space<vmem>>, %arg5: memref<1x128xf32, #tpu.memory_space<vmem>>, %arg6: memref<256x128xbf16, #tpu.memory_space<vmem>>, %arg7: memref<1x128xf32, #tpu.memory_space<vmem>>, %arg8: memref<8x128xbf16, #tpu.memory_space<vmem>>) attributes {dimension_semantics = [#tpu.dimension_semantics<parallel>], iteration_bounds = array<i64: 1>, scalar_prefetch = 0 : i64, scratch_operands = 0 : i64, tpu.core_type = #tpu.core_type<tc>, window_params = [{transform_indices = @transform_0, window_bounds = array<i64: 8, 256>}, {pipeline_mode = #tpu.pipeline_mode<synchronous>, transform_indices = @transform_1, window_bounds = array<i64: 1, 128>}, {pipeline_mode = #tpu.pipeline_mode<synchronous>, transform_indices = @transform_2, window_bounds = array<i64: 1, 128>}, {pipeline_mode = #tpu.pipeline_mode<synchronous>, transform_indices = @transform_3, window_bounds = array<i64: 128, 128>}, {pipeline_mode = #tpu.pipeline_mode<synchronous>, transform_indices = @transform_4, window_bounds = array<i64: 1, 128>}, {pipeline_mode = #tpu.pipeline_mode<synchronous>, transform_indices = @transform_5, window_bounds = array<i64: 256, 128>}, {pipeline_mode = #tpu.pipeline_mode<synchronous>, transform_indices = @transform_6, window_bounds = array<i64: 1, 128>}, {transform_indices = @transform_7, window_bounds = array<i64: 8, 128>}]} {
    %c0 = arith.constant 0 : index
    %c0_0 = arith.constant 0 : index
    %0 = vector.load %arg2[%c0, %c0_0] : memref<1x128xf32, #tpu.memory_space<vmem>>, vector<1x128xf32>
    %c0_1 = arith.constant 0 : index
    %c0_2 = arith.constant 0 : index
    %1 = vector.load %arg3[%c0_1, %c0_2] : memref<1x128xf32, #tpu.memory_space<vmem>>, vector<1x128xf32>
    %c0_3 = arith.constant 0 : index
    %c0_4 = arith.constant 0 : index
    %2 = vector.load %arg4[%c0_3, %c0_4] : memref<128x128xbf16, #tpu.memory_space<vmem>>, vector<128x128xbf16>
    %c0_5 = arith.constant 0 : index
    %c0_6 = arith.constant 0 : index
    %3 = vector.load %arg5[%c0_5, %c0_6] : memref<1x128xf32, #tpu.memory_space<vmem>>, vector<1x128xf32>
    %c0_7 = arith.constant 0 : index
    %c0_8 = arith.constant 0 : index
    %4 = vector.load %arg1[%c0_7, %c0_8] : memref<8x256xbf16, #tpu.memory_space<vmem>>, vector<8x128xbf16>
    %5 = arith.extf %4 : vector<8x128xbf16> to vector<8x128xf32>
    %cst = arith.constant dense<0.000000e+00> : vector<8xf32>
    %6 = vector.multi_reduction <add>, %5, %cst [1] : vector<8x128xf32> to vector<8xf32>
    %7 = vector.shape_cast %6 : vector<8xf32> to vector<8x1xf32>
    %cst_9 = arith.constant 1.280000e+02 : f32
    %8 = vector.broadcast %cst_9 : f32 to vector<8x1xf32>
    %9 = arith.divf %7, %8 : vector<8x1xf32>
    %10 = arith.mulf %5, %5 : vector<8x128xf32>
    %cst_10 = arith.constant dense<0.000000e+00> : vector<8xf32>
    %11 = vector.multi_reduction <add>, %10, %cst_10 [1] : vector<8x128xf32> to vector<8xf32>
    %12 = vector.shape_cast %11 : vector<8xf32> to vector<8x1xf32>
    %cst_11 = arith.constant 1.280000e+02 : f32
    %13 = vector.broadcast %cst_11 : f32 to vector<8x1xf32>
    %14 = arith.divf %12, %13 : vector<8x1xf32>
    %15 = arith.mulf %9, %9 : vector<8x1xf32>
    %16 = arith.subf %14, %15 : vector<8x1xf32>
    %cst_12 = arith.constant 9.99999974E-6 : f32
    %17 = vector.broadcast %cst_12 : f32 to vector<8x1xf32>
    %18 = arith.addf %16, %17 : vector<8x1xf32>
    %19 = math.rsqrt %18 : vector<8x1xf32>
    %20 = vector.broadcast %9 : vector<8x1xf32> to vector<8x128xf32>
    %21 = arith.subf %5, %20 : vector<8x128xf32>
    %22 = vector.broadcast %19 : vector<8x1xf32> to vector<8x128xf32>
    %23 = arith.mulf %21, %22 : vector<8x128xf32>
    %24 = vector.broadcast %0 : vector<1x128xf32> to vector<8x128xf32>
    %25 = arith.mulf %23, %24 : vector<8x128xf32>
    %26 = vector.broadcast %1 : vector<1x128xf32> to vector<8x128xf32>
    %27 = arith.addf %25, %26 : vector<8x128xf32>
    %28 = arith.truncf %27 : vector<8x128xf32> to vector<8x128xbf16>
    %cst_13 = arith.constant dense<0.000000e+00> : vector<8x128xf32>
    %29 = tpu.matmul %28, %2, %cst_13 {dimension_numbers = #tpu.dot_dimension_numbers<[1], [0], [0], [1], [0, 0, 1, 1], [], []>} : vector<8x128xbf16>, vector<128x128xbf16>, vector<8x128xf32> -> vector<8x128xf32>
    %30 = vector.broadcast %3 : vector<1x128xf32> to vector<8x128xf32>
    %31 = arith.addf %29, %30 : vector<8x128xf32>
    %cst_14 = arith.constant 0.000000e+00 : f32
    %32 = vector.broadcast %cst_14 : f32 to vector<8x128xf32>
    %33 = arith.maximumf %31, %32 : vector<8x128xf32>
    %34 = arith.truncf %33 : vector<8x128xf32> to vector<8x128xbf16>
    %c0_15 = arith.constant 0 : index
    %c128 = arith.constant 128 : index
    %35 = vector.load %arg1[%c0_15, %c128] : memref<8x256xbf16, #tpu.memory_space<vmem>>, vector<8x128xbf16>
    %36 = arith.extf %35 : vector<8x128xbf16> to vector<8x128xf32>
    %cst_16 = arith.constant dense<0.000000e+00> : vector<8xf32>
    %37 = vector.multi_reduction <add>, %36, %cst_16 [1] : vector<8x128xf32> to vector<8xf32>
    %38 = vector.shape_cast %37 : vector<8xf32> to vector<8x1xf32>
    %cst_17 = arith.constant 1.280000e+02 : f32
    %39 = vector.broadcast %cst_17 : f32 to vector<8x1xf32>
    %40 = arith.divf %38, %39 : vector<8x1xf32>
    %41 = arith.mulf %36, %36 : vector<8x128xf32>
    %cst_18 = arith.constant dense<0.000000e+00> : vector<8xf32>
    %42 = vector.multi_reduction <add>, %41, %cst_18 [1] : vector<8x128xf32> to vector<8xf32>
    %43 = vector.shape_cast %42 : vector<8xf32> to vector<8x1xf32>
    %cst_19 = arith.constant 1.280000e+02 : f32
    %44 = vector.broadcast %cst_19 : f32 to vector<8x1xf32>
    %45 = arith.divf %43, %44 : vector<8x1xf32>
    %46 = arith.mulf %40, %40 : vector<8x1xf32>
    %47 = arith.subf %45, %46 : vector<8x1xf32>
    %cst_20 = arith.constant 9.99999974E-6 : f32
    %48 = vector.broadcast %cst_20 : f32 to vector<8x1xf32>
    %49 = arith.addf %47, %48 : vector<8x1xf32>
    %50 = math.rsqrt %49 : vector<8x1xf32>
    %51 = vector.broadcast %40 : vector<8x1xf32> to vector<8x128xf32>
    %52 = arith.subf %36, %51 : vector<8x128xf32>
    %53 = vector.broadcast %50 : vector<8x1xf32> to vector<8x128xf32>
    %54 = arith.mulf %52, %53 : vector<8x128xf32>
    %55 = vector.broadcast %0 : vector<1x128xf32> to vector<8x128xf32>
    %56 = arith.mulf %54, %55 : vector<8x128xf32>
    %57 = vector.broadcast %1 : vector<1x128xf32> to vector<8x128xf32>
    %58 = arith.addf %56, %57 : vector<8x128xf32>
    %59 = arith.truncf %58 : vector<8x128xf32> to vector<8x128xbf16>
    %cst_21 = arith.constant dense<0.000000e+00> : vector<8x128xf32>
    %60 = tpu.matmul %59, %2, %cst_21 {dimension_numbers = #tpu.dot_dimension_numbers<[1], [0], [0], [1], [0, 0, 1, 1], [], []>} : vector<8x128xbf16>, vector<128x128xbf16>, vector<8x128xf32> -> vector<8x128xf32>
    %61 = vector.broadcast %3 : vector<1x128xf32> to vector<8x128xf32>
    %62 = arith.addf %60, %61 : vector<8x128xf32>
    %cst_22 = arith.constant 0.000000e+00 : f32
    %63 = vector.broadcast %cst_22 : f32 to vector<8x128xf32>
    %64 = arith.maximumf %62, %63 : vector<8x128xf32>
    %65 = arith.truncf %64 : vector<8x128xf32> to vector<8x128xbf16>
    %66 = tpu.concatenate %34, %65 in 1 : vector<8x128xbf16>, vector<8x128xbf16> -> vector<8x256xbf16>
    %c0_23 = arith.constant 0 : index
    %c0_24 = arith.constant 0 : index
    %67 = vector.load %arg6[%c0_23, %c0_24] : memref<256x128xbf16, #tpu.memory_space<vmem>>, vector<256x128xbf16>
    %cst_25 = arith.constant dense<0.000000e+00> : vector<8x128xf32>
    %68 = tpu.matmul %66, %67, %cst_25 {dimension_numbers = #tpu.dot_dimension_numbers<[1], [0], [0], [1], [0, 0, 1, 1], [], []>} : vector<8x256xbf16>, vector<256x128xbf16>, vector<8x128xf32> -> vector<8x128xf32>
    %c0_26 = arith.constant 0 : index
    %c0_27 = arith.constant 0 : index
    %69 = vector.load %arg7[%c0_26, %c0_27] : memref<1x128xf32, #tpu.memory_space<vmem>>, vector<1x128xf32>
    %70 = vector.broadcast %69 : vector<1x128xf32> to vector<8x128xf32>
    %71 = arith.addf %68, %70 : vector<8x128xf32>
    %72 = arith.truncf %71 : vector<8x128xf32> to vector<8x128xbf16>
    %c0_28 = arith.constant 0 : index
    %c0_29 = arith.constant 0 : index
    %73 = vector.load %arg8[%c0_28, %c0_29] : memref<8x128xbf16, #tpu.memory_space<vmem>>, vector<8x128xbf16>
    tpu.vector_store %arg8[%c0_28, %c0_29], %72 {strides = array<i32>} : memref<8x128xbf16, #tpu.memory_space<vmem>>, vector<8x128xbf16>,
    return
  }
  func.func @transform_0(%arg0: i32) -> (i32, i32) {
    %c0_i32 = arith.constant 0 : i32
    %c0_i32_0 = arith.constant 0 : i32
    return %arg0, %c0_i32 : i32, i32
  }
  func.func @transform_1(%arg0: i32) -> (i32, i32) {
    %c0_i32 = arith.constant 0 : i32
    %c0_i32_0 = arith.constant 0 : i32
    %c0_i32_1 = arith.constant 0 : i32
    return %c0_i32, %c0_i32_0 : i32, i32
  }
  func.func @transform_2(%arg0: i32) -> (i32, i32) {
    %c0_i32 = arith.constant 0 : i32
    %c0_i32_0 = arith.constant 0 : i32
    %c0_i32_1 = arith.constant 0 : i32
    return %c0_i32, %c0_i32_0 : i32, i32
  }
  func.func @transform_3(%arg0: i32) -> (i32, i32) {
    %c0_i32 = arith.constant 0 : i32
    %c0_i32_0 = arith.constant 0 : i32
    %c0_i32_1 = arith.constant 0 : i32
    return %c0_i32, %c0_i32_0 : i32, i32
  }
  func.func @transform_4(%arg0: i32) -> (i32, i32) {
    %c0_i32 = arith.constant 0 : i32
    %c0_i32_0 = arith.constant 0 : i32
    %c0_i32_1 = arith.constant 0 : i32
    return %c0_i32, %c0_i32_0 : i32, i32
  }
  func.func @transform_5(%arg0: i32) -> (i32, i32) {
    %c0_i32 = arith.constant 0 : i32
    %c0_i32_0 = arith.constant 0 : i32
    %c0_i32_1 = arith.constant 0 : i32
    return %c0_i32, %c0_i32_0 : i32, i32
  }
  func.func @transform_6(%arg0: i32) -> (i32, i32) {
    %c0_i32 = arith.constant 0 : i32
    %c0_i32_0 = arith.constant 0 : i32
    %c0_i32_1 = arith.constant 0 : i32
    return %c0_i32, %c0_i32_0 : i32, i32
  }
  func.func @transform_7(%arg0: i32) -> (i32, i32) {
    %c0_i32 = arith.constant 0 : i32
    %c0_i32_0 = arith.constant 0 : i32
    return %arg0, %c0_i32 : i32, i32
  }
}

</mosaic_0001>

<llo_original>
// kernel: tpu_custom_call.1
$region0: #{tpu_custom_call.1}
  #allocation0 [shape = 'u32[]', space=smem, size = 0x4, offset = 0x4, fixed_abs, tag = 'smem constant byte address 0x4 - core index']
  #allocation1 [shape = 'u32[144,128]{1,0:T(1,128)}', space=vmem, size = 0x12000, scoped, tag = 'internal scratch']
  %s0 = inlined_call_operand.hbm [shape: bf16[8,256], index: 0, kind: input, shape index: {}]
  %s1 = inlined_call_operand.vmem [shape: f32[1,128], index: 1, kind: input, shape index: {}]
  %s2 = inlined_call_operand.vmem [shape: f32[1,128], index: 2, kind: input, shape index: {}]
  %s3 = inlined_call_operand.hbm [shape: bf16[128,128], index: 3, kind: input, shape index: {}]
  %s4 = inlined_call_operand.vmem [shape: f32[1,128], index: 4, kind: input, shape index: {}]
  %s5 = inlined_call_operand.hbm [shape: bf16[256,128], index: 5, kind: input, shape index: {}]
  %s6 = inlined_call_operand.vmem [shape: f32[1,128], index: 6, kind: input, shape index: {}]
  %s7 = inlined_call_operand.hbm [shape: bf16[8,128], index: 7, kind: output, shape index: {}]
  %s8 = sld [smem:[#allocation0]]
  $region50: #{tpu_custom_call.1} parent=0
    _
  %s10 = ssub.s32 1, %s8
  %s11 = scalar_select 0, %s10, %s8
  $region1: #{tpu_custom_call.1} parent=0
    #allocation2 [shape = 'u8[4096]{0}', space=vmem, size = 0x1000, scoped, tag = 'input window, operand 0, single buffered']
    #allocation3 [shape = 's32[1]{0}', space=sflag, size = 0x4, scoped, tag = 'scoped memory for tpu_custom_call.1']
    #allocation4 [shape = 's32[1]{0}', space=sflag, size = 0x4, scoped, tag = 'scoped memory for tpu_custom_call.1']
    #allocation5 [shape = 'u8[32768]{0}', space=vmem, size = 0x8000, scoped, tag = 'input window, operand 3, single buffered']
    #allocation6 [shape = 's32[1]{0}', space=sflag, size = 0x4, scoped, tag = 'scoped memory for tpu_custom_call.1']
    #allocation7 [shape = 'u8[65536]{0}', space=vmem, size = 0x10000, scoped, tag = 'input window, operand 5, single buffered']
    #allocation8 [shape = 'u8[2048]{0}', space=vmem, size = 0x800, scoped, tag = 'output window, operand 0, single buffered']
    %12 = vsyncpa [#allocation3], 0
    %13 = vsyncpa [#allocation6], 0
    %14 = vsyncpa [#allocation4], 0
    // Predicated region
    $region2: #{tpu_custom_call.1} parent=1 // pred_check
      _
    $region3: #{tpu_custom_call.1} parent=1 // pred_check_branch
      %16 = sbr.rel (0) target = $region5
    $region4: #{tpu_custom_call.1} parent=1 // pred_region
      %s18 = ssub.s32 128, 128
      %19 = vsyncadd [#allocation3], %s18
      %s21 = sshll.u32 [#allocation2], 4
      %s22 = int_to_ptr.vmem [resolvable:$true] %s21
      %24 = dma.hbm_to_vmem [thread:$0]  %s0, 128, %s22, [#allocation3]
    $region5: #{tpu_custom_call.1} parent=1 // pred_fallthru
      _
    // Predicated region
    $region6: #{tpu_custom_call.1} parent=1 // pred_check
      _
    $region7: #{tpu_custom_call.1} parent=1 // pred_check_branch
      %26 = sbr.rel (0) target = $region9
    $region8: #{tpu_custom_call.1} parent=1 // pred_region
      _
    $region9: #{tpu_custom_call.1} parent=1 // pred_fallthru
      _
    // Predicated region
    $region10: #{tpu_custom_call.1} parent=1 // pred_check
      _
    $region11: #{tpu_custom_call.1} parent=1 // pred_check_branch
      %28 = sbr.rel (0) target = $region13
    $region12: #{tpu_custom_call.1} parent=1 // pred_region
      _
    $region13: #{tpu_custom_call.1} parent=1 // pred_fallthru
      _
    // Predicated region
    $region14: #{tpu_custom_call.1} parent=1 // pred_check
      _
    $region15: #{tpu_custom_call.1} parent=1 // pred_check_branch
      %30 = sbr.rel (0) target = $region17
    $region16: #{tpu_custom_call.1} parent=1 // pred_region
      %s32 = ssub.s32 1024, 1024
      %33 = vsyncadd [#allocation6], %s32
      %s34 = sshll.u32 [#allocation5], 4
      %s35 = int_to_ptr.vmem [resolvable:$true] %s34
      %40 = dma.hbm_to_vmem [thread:$0]  %s3, 1024, %s35, [#allocation6], 64, 64, 4
    $region17: #{tpu_custom_call.1} parent=1 // pred_fallthru
      _
    // Predicated region
    $region18: #{tpu_custom_call.1} parent=1 // pred_check
      _
    $region19: #{tpu_custom_call.1} parent=1 // pred_check_branch
      %42 = sbr.rel (0) target = $region21
    $region20: #{tpu_custom_call.1} parent=1 // pred_region
      _
    $region21: #{tpu_custom_call.1} parent=1 // pred_fallthru
      _
    // Predicated region
    $region22: #{tpu_custom_call.1} parent=1 // pred_check
      _
    $region23: #{tpu_custom_call.1} parent=1 // pred_check_branch
      %44 = sbr.rel (0) target = $region25
    $region24: #{tpu_custom_call.1} parent=1 // pred_region
      %s46 = ssub.s32 2048, 2048
      %47 = vsyncadd [#allocation6], %s46
      %s48 = sshll.u32 [#allocation7], 4
      %s49 = int_to_ptr.vmem [resolvable:$true] %s48
      %54 = dma.hbm_to_vmem [thread:$0]  %s5, 2048, %s49, [#allocation6], 64, 64, 4
    $region25: #{tpu_custom_call.1} parent=1 // pred_fallthru
      _
    // Predicated region
    $region26: #{tpu_custom_call.1} parent=1 // pred_check
      _
    $region27: #{tpu_custom_call.1} parent=1 // pred_check_branch
      %56 = sbr.rel (0) target = $region29
    $region28: #{tpu_custom_call.1} parent=1 // pred_region
      _
    $region29: #{tpu_custom_call.1} parent=1 // pred_fallthru
      _
    // Predicated region
    $region30: #{tpu_custom_call.1} parent=1 // pred_check
      _
    $region31: #{tpu_custom_call.1} parent=1 // pred_check_branch
      %58 = sbr.rel (0) target = $region33
    $region32: #{tpu_custom_call.1} parent=1 // pred_region
      %59 = dma.done [#allocation3], 128
    $region33: #{tpu_custom_call.1} parent=1 // pred_fallthru
      _
    // Predicated region
    $region34: #{tpu_custom_call.1} parent=1 // pred_check
      _
    $region35: #{tpu_custom_call.1} parent=1 // pred_check_branch
      %61 = sbr.rel (0) target = $region37
    $region36: #{tpu_custom_call.1} parent=1 // pred_region
      %62 = dma.done [#allocation6], 1024
    $region37: #{tpu_custom_call.1} parent=1 // pred_fallthru
      _
    // Predicated region
    $region38: #{tpu_custom_call.1} parent=1 // pred_check
      _
    $region39: #{tpu_custom_call.1} parent=1 // pred_check_branch
      %64 = sbr.rel (0) target = $region41
    $region40: #{tpu_custom_call.1} parent=1 // pred_region
      %65 = dma.done [#allocation6], 2048
    $region41: #{tpu_custom_call.1} parent=1 // pred_fallthru
      _
    %v67 = vld [vmem:[%s1] sm:$0x1]
    %v68 = vld [vmem:[%s2] sm:$0x1]
    %v69 = vld [vmem:[#allocation5] sm:$0xf]
    %v70 = vld [vmem:[#allocation5 + $0x4] sm:$0xf]
    %v71 = vld [vmem:[#allocation5 + $0x8] sm:$0xf]
    %v72 = vld [vmem:[#allocation5 + $0xc] sm:$0xf]
    %v73 = vld [vmem:[#allocation5 + $0x10] sm:$0xf]
    %v74 = vld [vmem:[#allocation5 + $0x14] sm:$0xf]
    %v75 = vld [vmem:[#allocation5 + $0x18] sm:$0xf]
    %v76 = vld [vmem:[#allocation5 + $0x1c] sm:$0xf]
    %v77 = vld [vmem:[#allocation5 + $0x20] sm:$0xf]
    %v78 = vld [vmem:[#allocation5 + $0x24] sm:$0xf]
    %v79 = vld [vmem:[#allocation5 + $0x28] sm:$0xf]
    %v80 = vld [vmem:[#allocation5 + $0x2c] sm:$0xf]
    %v81 = vld [vmem:[#allocation5 + $0x30] sm:$0xf]
    %v82 = vld [vmem:[#allocation5 + $0x34] sm:$0xf]
    %v83 = vld [vmem:[#allocation5 + $0x38] sm:$0xf]
    %v84 = vld [vmem:[#allocation5 + $0x3c] sm:$0xf]
    %v85 = vld [vmem:[%s4] sm:$0x1]
    %v86 = vld [vmem:[#allocation2] sm:$0xf]
    %v87 = vunpack.c.l.bf16 %v86
    %88 = vadd.xlane.f32.xlu0 %v87
    %v89 = vpop.xlane.xlu0 %88
    %v90 = vrcp.pop 128.0
    %v91 = vmul.f32 %v89, %v90
    %v92 = vmul.f32 %v87, %v87
    %93 = vadd.xlane.f32.xlu0 %v92
    %v94 = vpop.xlane.xlu0 %93
    %v95 = vmul.f32 %v94, %v90
    %v96 = vmul.f32 %v91, %v91
    %v97 = vsub.f32 %v95, %v96
    %v98 = vadd.f32 %v97, 1e-05
    %v99 = vrsqrt.pop %v98
    %v100 = vsub.f32 %v87, %v91
    %v101 = vmul.f32 %v100, %v99
    %v103 = vlaneseq
    %v104 = vshrl.u32 %v103, 7
    %v105 = vsub.s32 0, %v104
    %v106 = vrot.slane %v67, %v105
    %v108 = vmul.f32 %v101, %v106
    %v110 = vlaneseq
    %v111 = vshrl.u32 %v110, 7
    %v112 = vsub.s32 0, %v111
    %v113 = vrot.slane %v68, %v112
    %v115 = vadd.f32 %v108, %v113
    %v116 = vpack.c.bf16 %v115, %v115
    %v118 = vlaneseq
    %v119 = vshrl.u32 %v118, 7
    %v120 = vsub.s32 0, %v119
    %v121 = vrot.slane %v85, %v120
    %v139 = vunpack.c.l.b16 %v69
    %v140 = vunpack.c.l.b16 %v70
    %v141 = vunpack.c.l.b16 %v71
    %v142 = vunpack.c.l.b16 %v72
    %v143 = vunpack.c.l.b16 %v73
    %v144 = vunpack.c.l.b16 %v74
    %v145 = vunpack.c.l.b16 %v75
    %v146 = vunpack.c.l.b16 %v76
    %v147 = vunpack.c.l.b16 %v77
    %v148 = vunpack.c.l.b16 %v78
    %v149 = vunpack.c.l.b16 %v79
    %v150 = vunpack.c.l.b16 %v80
    %v151 = vunpack.c.l.b16 %v81
    %v152 = vunpack.c.l.b16 %v82
    %v153 = vunpack.c.l.b16 %v83
    %v154 = vunpack.c.l.b16 %v84
    %v155 = vpack.c.b16 %v140, %v139
    %v156 = vpack.c.b16 %v142, %v141
    %v157 = vpack.c.b16 %v144, %v143
    %v158 = vpack.c.b16 %v146, %v145
    %v159 = vpack.c.b16 %v148, %v147
    %v160 = vpack.c.b16 %v150, %v149
    %v161 = vpack.c.b16 %v152, %v151
    %v162 = vpack.c.b16 %v154, %v153
    %171 = vmatprep.subr.bf16.mxu0 0
    %172 = vmatpush1.bf16.msra.mxu0 %v155
    %173 = vmatprep.subr.bf16.mxu0 0
    %174 = vmatpush1.bf16.msra.mxu0 %v156
    %175 = vmatprep.subr.bf16.mxu0 0
    %176 = vmatpush1.bf16.msra.mxu0 %v157
    %177 = vmatprep.subr.bf16.mxu0 0
    %178 = vmatpush1.bf16.msra.mxu0 %v158
    %179 = vmatprep.subr.bf16.mxu0 0
    %180 = vmatpush1.bf16.msra.mxu0 %v159
    %181 = vmatprep.subr.bf16.mxu0 0
    %182 = vmatpush1.bf16.msra.mxu0 %v160
    %183 = vmatprep.subr.bf16.mxu0 0
    %184 = vmatpush1.bf16.msra.mxu0 %v161
    %185 = vmatprep.subr.bf16.mxu0 0
    %186 = vmatpush1.bf16.msra.mxu0 %v162
    %187 = vmatprep.subr.bf16.mxu0 0
    %188 = vmatpush1.bf16.msra.mxu0 0
    %189 = vmatprep.subr.bf16.mxu0 0
    %190 = vmatpush1.bf16.msra.mxu0 0
    %191 = vmatprep.subr.bf16.mxu0 0
    %192 = vmatpush1.bf16.msra.mxu0 0
    %193 = vmatprep.subr.bf16.mxu0 0
    %194 = vmatpush1.bf16.msra.mxu0 0
    %195 = vmatprep.subr.bf16.mxu0 0
    %196 = vmatpush1.bf16.msra.mxu0 0
    %197 = vmatprep.subr.bf16.mxu0 0
    %198 = vmatpush1.bf16.msra.mxu0 0
    %199 = vmatprep.subr.bf16.mxu0 0
    %200 = vmatpush1.bf16.msra.mxu0 0
    %201 = vmatprep.subr.bf16.mxu0 0
    %202 = vmatpush1.bf16.msra.mxu0 0
    %203 = vmatprep.mubr.bf16.mxu0 0
    %204 = vmatmul.mubr.bf16.gmra.mrb[0].mxu0 %v116
    %v205 = vpop.f32.mrb[0].mxu0
    %v206 = vadd.f32 %v121, %v205
    %v207 = vpop.f32.mrb[0].mxu0
    %v208 = vpop.f32.mrb[0].mxu0
    %v209 = vpop.f32.mrb[0].mxu0
    %210 = vdwg.mxu0
    %v211 = vmax.f32 %v206, 0.0
    %v212 = vpack.c.bf16 %v211, %v211
    %v213 = vld [vmem:[#allocation2 + $0x4] sm:$0xf]
    %v214 = vunpack.c.l.bf16 %v213
    %215 = vadd.xlane.f32.xlu0 %v214
    %v216 = vpop.xlane.xlu0 %215
    %v217 = vmul.f32 %v216, %v90
    %v218 = vmul.f32 %v214, %v214
    %219 = vadd.xlane.f32.xlu0 %v218
    %v220 = vpop.xlane.xlu0 %219
    %v221 = vmul.f32 %v220, %v90
    %v222 = vmul.f32 %v217, %v217
    %v223 = vsub.f32 %v221, %v222
    %v224 = vadd.f32 %v223, 1e-05
    %v225 = vrsqrt.pop %v224
    %v226 = vsub.f32 %v214, %v217
    %v227 = vmul.f32 %v226, %v225
    %v228 = vmul.f32 %v227, %v106
    %v229 = vadd.f32 %v228, %v113
    %v230 = vpack.c.bf16 %v229, %v229
    %231 = vmatprep.subr.bf16.mxu0 0
    %232 = vmatpush1.bf16.msra.mxu0 %v155
    %233 = vmatprep.subr.bf16.mxu0 0
    %234 = vmatpush1.bf16.msra.mxu0 %v156
    %235 = vmatprep.subr.bf16.mxu0 0
    %236 = vmatpush1.bf16.msra.mxu0 %v157
    %237 = vmatprep.subr.bf16.mxu0 0
    %238 = vmatpush1.bf16.msra.mxu0 %v158
    %239 = vmatprep.subr.bf16.mxu0 0
    %240 = vmatpush1.bf16.msra.mxu0 %v159
    %241 = vmatprep.subr.bf16.mxu0 0
    %242 = vmatpush1.bf16.msra.mxu0 %v160
    %243 = vmatprep.subr.bf16.mxu0 0
    %244 = vmatpush1.bf16.msra.mxu0 %v161
    %245 = vmatprep.subr.bf16.mxu0 0
    %246 = vmatpush1.bf16.msra.mxu0 %v162
    %247 = vmatprep.subr.bf16.mxu0 0
    %248 = vmatpush1.bf16.msra.mxu0 0
    %249 = vmatprep.subr.bf16.mxu0 0
    %250 = vmatpush1.bf16.msra.mxu0 0
    %251 = vmatprep.subr.bf16.mxu0 0
    %252 = vmatpush1.bf16.msra.mxu0 0
    %253 = vmatprep.subr.bf16.mxu0 0
    %254 = vmatpush1.bf16.msra.mxu0 0
    %255 = vmatprep.subr.bf16.mxu0 0
    %256 = vmatpush1.bf16.msra.mxu0 0
    %257 = vmatprep.subr.bf16.mxu0 0
    %258 = vmatpush1.bf16.msra.mxu0 0
    %259 = vmatprep.subr.bf16.mxu0 0
    %260 = vmatpush1.bf16.msra.mxu0 0
    %261 = vmatprep.subr.bf16.mxu0 0
    %262 = vmatpush1.bf16.msra.mxu0 0
    %263 = vmatprep.mubr.bf16.mxu0 0
    %264 = vmatmul.mubr.bf16.gmra.mrb[0].mxu0 %v230
    %v265 = vpop.f32.mrb[0].mxu0
    %v266 = vadd.f32 %v121, %v265
    %v267 = vpop.f32.mrb[0].mxu0
    %v268 = vpop.f32.mrb[0].mxu0
    %v269 = vpop.f32.mrb[0].mxu0
    %270 = vdwg.mxu0
    %v271 = vmax.f32 %v266, 0.0
    %v272 = vpack.c.bf16 %v271, %v271
    %v273 = vld [vmem:[#allocation7] sm:$0xf]
    %v274 = vld [vmem:[#allocation7 + $0x4] sm:$0xf]
    %v275 = vld [vmem:[#allocation7 + $0x8] sm:$0xf]
    %v276 = vld [vmem:[#allocation7 + $0xc] sm:$0xf]
    %v277 = vld [vmem:[#allocation7 + $0x10] sm:$0xf]
    %v278 = vld [vmem:[#allocation7 + $0x14] sm:$0xf]
    %v279 = vld [vmem:[#allocation7 + $0x18] sm:$0xf]
    %v280 = vld [vmem:[#allocation7 + $0x1c] sm:$0xf]
    %v281 = vld [vmem:[#allocation7 + $0x20] sm:$0xf]
    %v282 = vld [vmem:[#allocation7 + $0x24] sm:$0xf]
    %v283 = vld [vmem:[#allocation7 + $0x28] sm:$0xf]
    %v284 = vld [vmem:[#allocation7 + $0x2c] sm:$0xf]
    %v285 = vld [vmem:[#allocation7 + $0x30] sm:$0xf]
    %v286 = vld [vmem:[#allocation7 + $0x34] sm:$0xf]
    %v287 = vld [vmem:[#allocation7 + $0x38] sm:$0xf]
    %v288 = vld [vmem:[#allocation7 + $0x3c] sm:$0xf]
    %v289 = vld [vmem:[#allocation7 + $0x40] sm:$0xf]
    %v290 = vld [vmem:[#allocation7 + $0x44] sm:$0xf]
    %v291 = vld [vmem:[#allocation7 + $0x48] sm:$0xf]
    %v292 = vld [vmem:[#allocation7 + $0x4c] sm:$0xf]
    %v293 = vld [vmem:[#allocation7 + $0x50] sm:$0xf]
    %v294 = vld [vmem:[#allocation7 + $0x54] sm:$0xf]
    %v295 = vld [vmem:[#allocation7 + $0x58] sm:$0xf]
    %v296 = vld [vmem:[#allocation7 + $0x5c] sm:$0xf]
    %v297 = vld [vmem:[#allocation7 + $0x60] sm:$0xf]
    %v298 = vld [vmem:[#allocation7 + $0x64] sm:$0xf]
    %v299 = vld [vmem:[#allocation7 + $0x68] sm:$0xf]
    %v300 = vld [vmem:[#allocation7 + $0x6c] sm:$0xf]
    %v301 = vld [vmem:[#allocation7 + $0x70] sm:$0xf]
    %v302 = vld [vmem:[#allocation7 + $0x74] sm:$0xf]
    %v303 = vld [vmem:[#allocation7 + $0x78] sm:$0xf]
    %v304 = vld [vmem:[#allocation7 + $0x7c] sm:$0xf]
    %v305 = vld [vmem:[%s6] sm:$0x1]
    %v307 = vlaneseq
    %v308 = vshrl.u32 %v307, 7
    %v309 = vsub.s32 0, %v308
    %v310 = vrot.slane %v305, %v309
    %v344 = vunpack.c.l.b16 %v273
    %v345 = vunpack.c.l.b16 %v274
    %v346 = vunpack.c.l.b16 %v275
    %v347 = vunpack.c.l.b16 %v276
    %v348 = vunpack.c.l.b16 %v277
    %v349 = vunpack.c.l.b16 %v278
    %v350 = vunpack.c.l.b16 %v279
    %v351 = vunpack.c.l.b16 %v280
    %v352 = vunpack.c.l.b16 %v281
    %v353 = vunpack.c.l.b16 %v282
    %v354 = vunpack.c.l.b16 %v283
    %v355 = vunpack.c.l.b16 %v284
    %v356 = vunpack.c.l.b16 %v285
    %v357 = vunpack.c.l.b16 %v286
    %v358 = vunpack.c.l.b16 %v287
    %v359 = vunpack.c.l.b16 %v288
    %v360 = vunpack.c.l.b16 %v289
    %v361 = vunpack.c.l.b16 %v290
    %v362 = vunpack.c.l.b16 %v291
    %v363 = vunpack.c.l.b16 %v292
    %v364 = vunpack.c.l.b16 %v293
    %v365 = vunpack.c.l.b16 %v294
    %v366 = vunpack.c.l.b16 %v295
    %v367 = vunpack.c.l.b16 %v296
    %v368 = vunpack.c.l.b16 %v297
    %v369 = vunpack.c.l.b16 %v298
    %v370 = vunpack.c.l.b16 %v299
    %v371 = vunpack.c.l.b16 %v300
    %v372 = vunpack.c.l.b16 %v301
    %v373 = vunpack.c.l.b16 %v302
    %v374 = vunpack.c.l.b16 %v303
    %v375 = vunpack.c.l.b16 %v304
    %v376 = vpack.c.b16 %v345, %v344
    %v377 = vpack.c.b16 %v347, %v346
    %v378 = vpack.c.b16 %v349, %v348
    %v379 = vpack.c.b16 %v351, %v350
    %v380 = vpack.c.b16 %v353, %v352
    %v381 = vpack.c.b16 %v355, %v354
    %v382 = vpack.c.b16 %v357, %v356
    %v383 = vpack.c.b16 %v359, %v358
    %v384 = vpack.c.b16 %v361, %v360
    %v385 = vpack.c.b16 %v363, %v362
    %v386 = vpack.c.b16 %v365, %v364
    %v387 = vpack.c.b16 %v367, %v366
    %v388 = vpack.c.b16 %v369, %v368
    %v389 = vpack.c.b16 %v371, %v370
    %v390 = vpack.c.b16 %v373, %v372
    %v391 = vpack.c.b16 %v375, %v374
    %408 = vmatprep.subr.bf16.mxu0 0
    %409 = vmatpush1.bf16.msra.mxu0 %v376
    %410 = vmatprep.subr.bf16.mxu0 0
    %411 = vmatpush1.bf16.msra.mxu0 %v377
    %412 = vmatprep.subr.bf16.mxu0 0
    %413 = vmatpush1.bf16.msra.mxu0 %v378
    %414 = vmatprep.subr.bf16.mxu0 0
    %415 = vmatpush1.bf16.msra.mxu0 %v379
    %416 = vmatprep.subr.bf16.mxu0 0
    %417 = vmatpush1.bf16.msra.mxu0 %v380
    %418 = vmatprep.subr.bf16.mxu0 0
    %419 = vmatpush1.bf16.msra.mxu0 %v381
    %420 = vmatprep.subr.bf16.mxu0 0
    %421 = vmatpush1.bf16.msra.mxu0 %v382
    %422 = vmatprep.subr.bf16.mxu0 0
    %423 = vmatpush1.bf16.msra.mxu0 %v383
    %424 = vmatprep.subr.bf16.mxu0 0
    %425 = vmatpush1.bf16.msra.mxu0 %v384
    %426 = vmatprep.subr.bf16.mxu0 0
    %427 = vmatpush1.bf16.msra.mxu0 %v385
    %428 = vmatprep.subr.bf16.mxu0 0
    %429 = vmatpush1.bf16.msra.mxu0 %v386
    %430 = vmatprep.subr.bf16.mxu0 0
    %431 = vmatpush1.bf16.msra.mxu0 %v387
    %432 = vmatprep.subr.bf16.mxu0 0
    %433 = vmatpush1.bf16.msra.mxu0 %v388
    %434 = vmatprep.subr.bf16.mxu0 0
    %435 = vmatpush1.bf16.msra.mxu0 %v389
    %436 = vmatprep.subr.bf16.mxu0 0
    %437 = vmatpush1.bf16.msra.mxu0 %v390
    %438 = vmatprep.subr.bf16.mxu0 0
    %439 = vmatpush1.bf16.msra.mxu0 %v391
    %440 = vmatprep.mubr.bf16.mxu0 %v272
    %441 = vmatmul.mubr.bf16.gmra.mrb[0].mxu0 %v212
    %v442 = vpop.f32.mrb[0].mxu0
    %v443 = vadd.f32 %v310, %v442
    %v444 = vpop.f32.mrb[0].mxu0
    %v445 = vpop.f32.mrb[0].mxu0
    %v446 = vpop.f32.mrb[0].mxu0
    %447 = vdwg.mxu0
    %v448 = vpack.c.bf16 %v443, %v443
    %449 = vst [vmem:[#allocation8] sm:$0xf] %v448
    // Predicated region
    $region42: #{tpu_custom_call.1} parent=1 // pred_check
      _
    $region43: #{tpu_custom_call.1} parent=1 // pred_check_branch
      %451 = sbr.rel (0) target = $region45
    $region44: #{tpu_custom_call.1} parent=1 // pred_region
      %s453 = ssub.s32 64, 64
      %454 = vsyncadd [#allocation4], %s453
      %s456 = sshll.u32 [#allocation8], 4
      %s457 = int_to_ptr.vmem [resolvable:$true] %s456
      %459 = dma.vmem_to_hbm [thread:$0]  %s457, 64, %s7, [#allocation4]
    $region45: #{tpu_custom_call.1} parent=1 // pred_fallthru
      _
    // Predicated region
    $region46: #{tpu_custom_call.1} parent=1 // pred_check
      _
    $region47: #{tpu_custom_call.1} parent=1 // pred_check_branch
      %461 = sbr.rel (0) target = $region49
    $region48: #{tpu_custom_call.1} parent=1 // pred_region
      %462 = dma.done [#allocation4], 64
    $region49: #{tpu_custom_call.1} parent=1 // pred_fallthru
      _
    %463 = vsyncpa [#allocation3], 1
    %464 = vsyncpa [#allocation6], 1
    %465 = vsyncpa [#allocation4], 1

</llo_original>
